<compile_context>
chip_gen: v7x
topology: tpu7x:2x2x1
jax: 0.10.0
libtpu: 0.0.40
codegen_flags: <defaults>
</compile_context>

<pallas_src>
import functools

import jax
import jax.numpy as jnp
from jax.experimental import pallas as pl
from jax.experimental.pallas import tpu as pltpu


def _kfac_ensemble_kernel(b2eff_ref,          # (S,) f32, SMEM (scalar prefetch): b2 + d2_s bias
                          xT_ref,             # (D1p, TM) bf16: x_aug^T batch tile
                          w1aug_ref,          # (H1, D1p) bf16: [W1 | b1], VMEM-resident
                          la1T_ref,           # (D1p, D1p) bf16: L_A1^T, VMEM-resident
                          lb1_ref,            # (H1, H1) bf16: L_B1, VMEM-resident
                          z1_ref,             # (1, H1, D1p) bf16: Z1_s for the current sample
                          w2eff_ref,          # (1, H1, 1) f32: (W2 + d2_s[:, :H1]) as a column
                          out_ref,            # (2, TM) f32: [mu ; unc], lane-dense
                          base1T_scr,         # (H1, TM) f32: mean-weight pre-activation
                          uT_scr,             # (D1p, TM) bf16: L_A1^T @ x_aug^T
                          c_scr, sum_scr, ssq_scr,   # (1, TM) f32: shifted running moments
                          *, num_samples):
    f32, bf16 = jnp.float32, jnp.bfloat16
    s = pl.program_id(1)

    # ---- sample-independent work: once per batch tile (s == 0), cached in scratch ----
    @pl.when(s == 0)
    def _():
        xT = xT_ref[...]
        # base pre-activation with the posterior-mean weights:  W1_aug @ x_aug^T
        base1T_scr[...] = jnp.dot(w1aug_ref[...], xT, preferred_element_type=f32)
        # re-associated KFAC factor, reused by every sample:  u^T = L_A1^T @ x_aug^T
        uT_scr[...] = jnp.dot(la1T_ref[...], xT, preferred_element_type=f32).astype(bf16)
        sum_scr[...] = jnp.zeros_like(sum_scr)
        ssq_scr[...] = jnp.zeros_like(ssq_scr)

    # ---- layer 1, per-sample matrix-normal perturbation (re-associated) ----
    #   (L_B1 @ Z1_s @ L_A1^T) @ x_aug^T  =  L_B1 @ (Z1_s @ u^T)
    pT = jnp.dot(z1_ref[0], uT_scr[...], preferred_element_type=f32)            # (H1, TM)
    pertT = jnp.dot(lb1_ref[...], pT.astype(bf16), preferred_element_type=f32)  # (H1, TM)
    hT = jnp.maximum(base1T_scr[...] + pertT, 0.0)                              # f32 ReLU (v5e-safe)

    # ---- layer 2: per-sample effective weights (precomputed in the wrapper) ----
    # y_s = W2eff_s @ h + b2eff_s  as an f32 VPU multiply + XLU sublane reduce (MXU stays free)
    y = jnp.sum(hT * w2eff_ref[0], axis=0, keepdims=True) + b2eff_ref[s]        # (1, TM)

    # ---- shifted running moments over the sample axis (no sumsq cancellation) ----
    @pl.when(s == 0)
    def _():
        c_scr[...] = y
    d = y - c_scr[...]
    sum_scr[...] += d
    ssq_scr[...] += d * d

    @pl.when(s == num_samples - 1)
    def _():
        # TODO(synk): dist_fam.merge_ensemble is distribution-specific; mean / population std
        # over samples is the common nn_ood case (torch.std's default would divide by S-1).
        inv_s = 1.0 / num_samples
        m = sum_scr[...] * inv_s
        mu = c_scr[...] + m
        var = ssq_scr[...] * inv_s - m * m
        out_ref[0:1, :] = mu
        out_ref[1:2, :] = jnp.sqrt(jnp.maximum(var, 0.0))


def pack_kfac_constants(params, inv_chol_factors):
    """One-time packing of z-independent operands (hoisted out of the per-forward path):
    augmented mean weights, pre-transposed / lane-padded Cholesky factors, bf16 casts."""
    f32, bf16 = jnp.float32, jnp.bfloat16
    w1, b1, w2, b2 = params
    la1, lb1, la2, lb2 = inv_chol_factors
    H1, Din = w1.shape
    D1 = Din + 1
    D1p = ((D1 + 127) // 128) * 128            # pad layer-1 fan-in (incl. bias) to a lane multiple

    w1aug = jnp.concatenate([w1, b1.reshape(H1, 1)], axis=1)      # (H1, D1)  [W1 | b1]
    w1aug = jnp.pad(w1aug, ((0, 0), (0, D1p - D1)))               # (H1, D1p)
    la1T = jnp.pad(la1.T, ((0, D1p - D1), (0, D1p - D1)))         # (D1p, D1p)

    return {
        'w1aug_bf16': w1aug.astype(bf16),
        'la1T_bf16': la1T.astype(bf16),
        'lb1_bf16': lb1.astype(bf16),
        'w2': w2.astype(f32),      # (1, H1)
        'b2': b2.astype(f32),      # (1, 1)
        'la2': la2.astype(f32),    # (H1+1, H1+1)
        'lb2': lb2.astype(f32),    # (1, 1)
    }


@jax.jit
def kfac_forward(x_nchw, packed, z1, z2):
    """KFAC ensemble forward pass. Returns (mu (N,1), unc (N,))."""
    f32, bf16 = jnp.float32, jnp.bfloat16
    w1aug, la1T, lb1 = packed['w1aug_bf16'], packed['la1T_bf16'], packed['lb1_bf16']
    H1, D1p = w1aug.shape
    S = z1.shape[0]
    D1 = z1.shape[2]                       # Din + 1

    N = x_nchw.shape[0]
    x = x_nchw.reshape(N, -1).astype(f32)  # (N, Din), row-major flatten (x.view(N,-1))

    # Batch tile (lane axis). Small / ragged batches fall back to a single whole-batch tile.
    # TODO(synk): pad very large ragged batches up to a multiple of 128 instead.
    TM = 256 if N % 256 == 0 else (128 if N % 128 == 0 else N)
    n_tiles = N // TM

    # x_aug^T, zero-padded on the fan-in axis to a full lane tile.
    x_aug = jnp.concatenate([x, jnp.ones((N, 1), f32)], axis=1)          # (N, D1)
    xT = jnp.pad(x_aug, ((0, 0), (0, D1p - D1))).T.astype(bf16)          # (D1p, N)

    # Per-sample layer-1 noise, padded to the same fan-in tile.
    z1p = jnp.pad(z1, ((0, 0), (0, 0), (0, D1p - D1))).astype(bf16)      # (S, H1, D1p)

    # Layer-2 samples are tiny (1 x (H1+1)): fold them into per-sample effective weights here.
    #   d2_s = lb2 * Z2_s @ L_A2^T ;  W2_s = W2 + d2_s[:, :H1] ;  b2_s = b2 + d2_s[:, H1]
    r2 = packed['lb2'][0, 0] * jnp.einsum('sij,kj->sik', z2, packed['la2'])[:, 0, :]   # (S, H1+1)
    w2eff = (packed['w2'] + r2[:, :H1]).reshape(S, H1, 1).astype(f32)    # (S, H1, 1)
    b2eff = (packed['b2'][0, 0] + r2[:, H1]).astype(f32)                 # (S,)

    kernel = functools.partial(_kfac_ensemble_kernel, num_samples=S)

    stats = pl.pallas_call(
        kernel,
        out_shape=jax.ShapeDtypeStruct((2, N), f32),
        grid_spec=pltpu.PrefetchScalarGridSpec(
            num_scalar_prefetch=1,                       # b2eff -> SMEM
            grid=(n_tiles, S),                           # batch tiles (parallel) x samples (reduction)
            in_specs=[
                pl.BlockSpec((D1p, TM), lambda n, s, _b2: (0, n)),        # x_aug^T tile
                pl.BlockSpec((H1, D1p), lambda n, s, _b2: (0, 0)),        # W1_aug   (resident)
                pl.BlockSpec((D1p, D1p), lambda n, s, _b2: (0, 0)),       # L_A1^T   (resident)
                pl.BlockSpec((H1, H1), lambda n, s, _b2: (0, 0)),         # L_B1     (resident)
                pl.BlockSpec((1, H1, D1p), lambda n, s, _b2: (s, 0, 0)),  # Z1_s
                pl.BlockSpec((1, H1, 1), lambda n, s, _b2: (s, 0, 0)),    # W2eff_s column
            ],
            out_specs=pl.BlockSpec((2, TM), lambda n, s, _b2: (0, n)),
            scratch_shapes=[
                pltpu.VMEM((H1, TM), f32),     # base1^T (mean-weight pre-activation)
                pltpu.VMEM((D1p, TM), bf16),   # u^T = L_A1^T @ x_aug^T
                pltpu.VMEM((1, TM), f32),      # shift c (sample-0 output)
                pltpu.VMEM((1, TM), f32),      # running sum of (y_s - c)
                pltpu.VMEM((1, TM), f32),      # running sum of (y_s - c)^2
            ]),
        compiler_params=pltpu.CompilerParams(
            dimension_semantics=("parallel", "arbitrary")),
    )(b2eff, xT, w1aug, la1T, lb1, z1p, w2eff)

    mu = stats[0, :].reshape(N, 1)
    unc = stats[1, :]
    return mu, unc


def _make_inv_chol(factor, norm, scale):
    """get_inv_factors / invert_factors glue (one-time setup, outside the kernel):
    Cholesky of the regularized inverse factor.
    # TODO(synk): matrix inverse / Cholesky have no clean Pallas equivalent; this is setup,
    # not the per-forward hot path, so it stays in plain JAX."""
    n = factor.shape[0]
    reg = jnp.sqrt(scale) * factor + jnp.sqrt(norm) * jnp.eye(n, dtype=jnp.float32)
    inv = jnp.linalg.inv(reg)
    inv = 0.5 * (inv + inv.T)   # symmetrize for numerical safety before Cholesky
    return jnp.linalg.cholesky(inv).astype(jnp.float32)


def _kfac_forward_reference(x_nchw, params, inv_chol_factors, z1, z2):
    """Pure-JAX reference implementing the original per-sample formulation (f32)."""
    N = x_nchw.shape[0]
    x = x_nchw.reshape(N, -1).astype(jnp.float32)
    w1, b1, w2, b2 = params
    la1, lb1, la2, lb2 = inv_chol_factors
    Din = x.shape[1]
    H1 = w1.shape[0]
    ys = []
    for s in range(z1.shape[0]):
        d1 = lb1 @ z1[s] @ la1.T                          # (H1, Din+1)
        w1_s = w1 + d1[:, :Din]
        b1_s = b1 + d1[:, Din:Din + 1].T
        h = jnp.maximum(x @ w1_s.T + b1_s, 0.0)
        d2 = lb2 @ z2[s] @ la2.T                          # (1, H1+1)
        w2_s = w2 + d2[:, :H1]
        b2_s = b2 + d2[:, H1:H1 + 1]
        ys.append(h @ w2_s.T + b2_s)
    y = jnp.stack(ys, axis=0)                             # (S, N, 1)
    return jnp.mean(y, axis=0), jnp.std(y, axis=0)[:, 0]


if __name__ == "__main__":
    # Small shapes consistent with the module: input_shape = [C, H, W] = [1, 8, 8]
    N, C, Hs, Ws = 8, 1, 8, 8
    Din = C * Hs * Ws          # 64
    H1 = 32                    # hidden width of the wrapped model
    num_samples = 10           # base_config['num_samples']
    norm, scale = 1.0, 1.0     # base_config['norm'], base_config['scale']

    key = jax.random.PRNGKey(0)
    keys = jax.random.split(key, 10)

    # posterior_mean (deterministic synthetic "trained model" parameters)
    w1 = 0.1 * jax.random.normal(keys[0], (H1, Din), dtype=jnp.float32)
    b1 = 0.1 * jax.random.normal(keys[1], (1, H1), dtype=jnp.float32)
    w2 = 0.1 * jax.random.normal(keys[2], (1, H1), dtype=jnp.float32)
    b2 = 0.1 * jax.random.normal(keys[3], (1, 1), dtype=jnp.float32)

    # KFAC factors (A over inputs+bias, B over outputs), built SPD deterministically.
    def spd(k, n):
        m = jax.random.normal(k, (n, n), dtype=jnp.float32)
        return m @ m.T / n + jnp.eye(n, dtype=jnp.float32)

    A1 = spd(keys[4], Din + 1)
    B1 = spd(keys[5], H1)
    A2 = spd(keys[6], H1 + 1)
    B2 = spd(keys[7], 1)

    la1 = _make_inv_chol(A1, norm, scale)
    lb1 = _make_inv_chol(B1, norm, scale)
    la2 = _make_inv_chol(A2, norm, scale)
    lb2 = _make_inv_chol(B2, norm, scale)

    # Per-sample standard-normal noise for the matrix-normal weight samples.
    z1 = jax.random.normal(keys[8], (num_samples, H1, Din + 1), dtype=jnp.float32)
    z2 = jax.random.normal(keys[9], (num_samples, 1, H1 + 1), dtype=jnp.float32)

    # Inputs: NCHW, like PyTorch.
    xkey = jax.random.fold_in(key, 123)
    x = jax.random.normal(xkey, (N, C, Hs, Ws), dtype=jnp.float32)

    params = (w1, b1, w2, b2)
    factors = (la1, lb1, la2, lb2)

    # One-time packing of z-independent operands (hoisted out of the per-call path).
    packed = pack_kfac_constants(params, factors)

    mu, unc = kfac_forward(x, packed, z1, z2)
    mu = jax.block_until_ready(mu)
    unc = jax.block_until_ready(unc)

    assert mu.shape == (N, 1) and unc.shape == (N,)
    assert bool(jnp.all(jnp.isfinite(mu))) and bool(jnp.all(jnp.isfinite(unc)))

    # Validate against the pure-JAX per-sample reference (layer-1 matmul operands are bf16,
    # so use loose tolerances; a math error would be O(1), bf16 noise is ~1e-1 at most).
    mu_ref, unc_ref = _kfac_forward_reference(x, params, factors, z1, z2)
    assert bool(jnp.allclose(mu[:, 0], mu_ref[:, 0], rtol=0.2, atol=0.3))
    assert bool(jnp.allclose(unc, unc_ref, rtol=0.2, atol=0.3))

    print("KERNEL_OK")
</pallas_src>

<mosaic_0001>
module attributes {stable_mosaic.version = 11 : i64} {
  func.func @_kfac_ensemble_kernel(%arg0: i32, %arg1: i32, %arg2: memref<10xf32, #tpu.memory_space<smem>>, %arg3: memref<128x8xbf16, #tpu.memory_space<vmem>>, %arg4: memref<32x128xbf16, #tpu.memory_space<vmem>>, %arg5: memref<128x128xbf16, #tpu.memory_space<vmem>>, %arg6: memref<32x32xbf16, #tpu.memory_space<vmem>>, %arg7: memref<1x32x128xbf16, #tpu.memory_space<vmem>>, %arg8: memref<1x32x1xf32, #tpu.memory_space<vmem>>, %arg9: memref<2x8xf32, #tpu.memory_space<vmem>>, %arg10: memref<32x8xf32, #tpu.memory_space<vmem>>, %arg11: memref<128x8xbf16, #tpu.memory_space<vmem>>, %arg12: memref<1x8xf32, #tpu.memory_space<vmem>>, %arg13: memref<1x8xf32, #tpu.memory_space<vmem>>, %arg14: memref<1x8xf32, #tpu.memory_space<vmem>>) attributes {dimension_semantics = [#tpu.dimension_semantics<parallel>, #tpu.dimension_semantics<arbitrary>], iteration_bounds = array<i64: 1, 10>, scalar_prefetch = 1 : i64, scratch_operands = 5 : i64, tpu.core_type = #tpu.core_type<tc>, window_params = [{transform_indices = @transform_0, window_bounds = array<i64: 128, 8>}, {pipeline_mode = #tpu.pipeline_mode<synchronous>, transform_indices = @transform_1, window_bounds = array<i64: 32, 128>}, {pipeline_mode = #tpu.pipeline_mode<synchronous>, transform_indices = @transform_2, window_bounds = array<i64: 128, 128>}, {pipeline_mode = #tpu.pipeline_mode<synchronous>, transform_indices = @transform_3, window_bounds = array<i64: 32, 32>}, {transform_indices = @transform_4, window_bounds = array<i64: 1, 32, 128>}, {transform_indices = @transform_5, window_bounds = array<i64: 1, 32, 1>}, {transform_indices = @transform_6, window_bounds = array<i64: 2, 8>}]} {
    %c0_i32 = arith.constant 0 : i32
    %0 = arith.cmpi eq, %arg1, %c0_i32 : i32
    %1 = arith.extui %0 : i1 to i32
    %c0_i32_0 = arith.constant 0 : i32
    %2 = arith.cmpi ne, %1, %c0_i32_0 : i32
    scf.if %2 {
      %c0_28 = arith.constant 0 : index
      %c0_29 = arith.constant 0 : index
      %39 = vector.load %arg3[%c0_28, %c0_29] : memref<128x8xbf16, #tpu.memory_space<vmem>>, vector<128x8xbf16>
      %c0_30 = arith.constant 0 : index
      %c0_31 = arith.constant 0 : index
      %40 = vector.load %arg4[%c0_30, %c0_31] : memref<32x128xbf16, #tpu.memory_space<vmem>>, vector<32x128xbf16>
      %cst_32 = arith.constant dense<0.000000e+00> : vector<32x8xf32>
      %41 = tpu.matmul %40, %39, %cst_32 {dimension_numbers = #tpu.dot_dimension_numbers<[1], [0], [0], [1], [0, 0, 1, 1], [], []>} : vector<32x128xbf16>, vector<128x8xbf16>, vector<32x8xf32> -> vector<32x8xf32>
      %c0_33 = arith.constant 0 : index
      %c0_34 = arith.constant 0 : index
      %42 = vector.load %arg10[%c0_33, %c0_34] : memref<32x8xf32, #tpu.memory_space<vmem>>, vector<32x8xf32>
      tpu.vector_store %arg10[%c0_33, %c0_34], %41 {strides = array<i32>} : memref<32x8xf32, #tpu.memory_space<vmem>>, vector<32x8xf32>,
      %c0_35 = arith.constant 0 : index
      %c0_36 = arith.constant 0 : index
      %43 = vector.load %arg5[%c0_35, %c0_36] : memref<128x128xbf16, #tpu.memory_space<vmem>>, vector<128x128xbf16>
      %cst_37 = arith.constant dense<0.000000e+00> : vector<128x8xf32>
      %44 = tpu.matmul %43, %39, %cst_37 {dimension_numbers = #tpu.dot_dimension_numbers<[1], [0], [0], [1], [0, 0, 1, 1], [], []>} : vector<128x128xbf16>, vector<128x8xbf16>, vector<128x8xf32> -> vector<128x8xf32>
      %45 = arith.truncf %44 : vector<128x8xf32> to vector<128x8xbf16>
      %c0_38 = arith.constant 0 : index
      %c0_39 = arith.constant 0 : index
      %46 = vector.load %arg11[%c0_38, %c0_39] : memref<128x8xbf16, #tpu.memory_space<vmem>>, vector<128x8xbf16>
      tpu.vector_store %arg11[%c0_38, %c0_39], %45 {strides = array<i32>} : memref<128x8xbf16, #tpu.memory_space<vmem>>, vector<128x8xbf16>,
      %cst_40 = arith.constant 0.000000e+00 : f32
      %47 = vector.broadcast %cst_40 : f32 to vector<1x8xf32>
      %c0_41 = arith.constant 0 : index
      %c0_42 = arith.constant 0 : index
      %48 = vector.load %arg13[%c0_41, %c0_42] : memref<1x8xf32, #tpu.memory_space<vmem>>, vector<1x8xf32>
      tpu.vector_store %arg13[%c0_41, %c0_42], %47 {strides = array<i32>} : memref<1x8xf32, #tpu.memory_space<vmem>>, vector<1x8xf32>,
      %cst_43 = arith.constant 0.000000e+00 : f32
      %49 = vector.broadcast %cst_43 : f32 to vector<1x8xf32>
      %c0_44 = arith.constant 0 : index
      %c0_45 = arith.constant 0 : index
      %50 = vector.load %arg14[%c0_44, %c0_45] : memref<1x8xf32, #tpu.memory_space<vmem>>, vector<1x8xf32>
      tpu.vector_store %arg14[%c0_44, %c0_45], %49 {strides = array<i32>} : memref<1x8xf32, #tpu.memory_space<vmem>>, vector<1x8xf32>,
    } else {
    }
    %c0 = arith.constant 0 : index
    %c0_1 = arith.constant 0 : index
    %c0_2 = arith.constant 0 : index
    %3 = vector.load %arg7[%c0, %c0_1, %c0_2] : memref<1x32x128xbf16, #tpu.memory_space<vmem>>, vector<1x32x128xbf16>
    %4 = vector.shape_cast %3 : vector<1x32x128xbf16> to vector<32x128xbf16>
    %c0_3 = arith.constant 0 : index
    %c0_4 = arith.constant 0 : index
    %5 = vector.load %arg11[%c0_3, %c0_4] : memref<128x8xbf16, #tpu.memory_space<vmem>>, vector<128x8xbf16>
    %cst = arith.constant dense<0.000000e+00> : vector<32x8xf32>
    %6 = tpu.matmul %4, %5, %cst {dimension_numbers = #tpu.dot_dimension_numbers<[1], [0], [0], [1], [0, 0, 1, 1], [], []>} : vector<32x128xbf16>, vector<128x8xbf16>, vector<32x8xf32> -> vector<32x8xf32>
    %c0_5 = arith.constant 0 : index
    %c0_6 = arith.constant 0 : index
    %7 = vector.load %arg6[%c0_5, %c0_6] : memref<32x32xbf16, #tpu.memory_space<vmem>>, vector<32x32xbf16>
    %8 = arith.truncf %6 : vector<32x8xf32> to vector<32x8xbf16>
    %cst_7 = arith.constant dense<0.000000e+00> : vector<32x8xf32>
    %9 = tpu.matmul %7, %8, %cst_7 {dimension_numbers = #tpu.dot_dimension_numbers<[1], [0], [0], [1], [0, 0, 1, 1], [], []>} : vector<32x32xbf16>, vector<32x8xbf16>, vector<32x8xf32> -> vector<32x8xf32>
    %c0_8 = arith.constant 0 : index
    %c0_9 = arith.constant 0 : index
    %10 = vector.load %arg10[%c0_8, %c0_9] : memref<32x8xf32, #tpu.memory_space<vmem>>, vector<32x8xf32>
    %11 = arith.addf %10, %9 : vector<32x8xf32>
    %cst_10 = arith.constant 0.000000e+00 : f32
    %12 = vector.broadcast %cst_10 : f32 to vector<32x8xf32>
    %13 = arith.maximumf %11, %12 : vector<32x8xf32>
    %c0_11 = arith.constant 0 : index
    %c0_12 = arith.constant 0 : index
    %c0_13 = arith.constant 0 : index
    %14 = vector.load %arg8[%c0_11, %c0_12, %c0_13] : memref<1x32x1xf32, #tpu.memory_space<vmem>>, vector<1x32x1xf32>
    %15 = vector.shape_cast %14 : vector<1x32x1xf32> to vector<32x1xf32>
    %16 = vector.broadcast %15 : vector<32x1xf32> to vector<32x8xf32>
    %17 = arith.mulf %13, %16 : vector<32x8xf32>
    %cst_14 = arith.constant dense<0.000000e+00> : vector<8xf32>
    %18 = vector.multi_reduction <add>, %17, %cst_14 [0] : vector<32x8xf32> to vector<8xf32>
    %19 = vector.shape_cast %18 : vector<8xf32> to vector<1x8xf32>
    %20 = arith.index_cast %arg1 : i32 to index
    %21 = memref.load %arg2[%20] : memref<10xf32, #tpu.memory_space<smem>>
    %22 = vector.broadcast %21 : f32 to vector<1x8xf32>
    %23 = arith.addf %19, %22 : vector<1x8xf32>
    %c0_i32_15 = arith.constant 0 : i32
    %24 = arith.cmpi eq, %arg1, %c0_i32_15 : i32
    %25 = arith.extui %24 : i1 to i32
    %c0_i32_16 = arith.constant 0 : i32
    %26 = arith.cmpi ne, %25, %c0_i32_16 : i32
    scf.if %26 {
      %c0_28 = arith.constant 0 : index
      %c0_29 = arith.constant 0 : index
      %39 = vector.load %arg12[%c0_28, %c0_29] : memref<1x8xf32, #tpu.memory_space<vmem>>, vector<1x8xf32>
      tpu.vector_store %arg12[%c0_28, %c0_29], %23 {strides = array<i32>} : memref<1x8xf32, #tpu.memory_space<vmem>>, vector<1x8xf32>,
    } else {
    }
    %c0_17 = arith.constant 0 : index
    %c0_18 = arith.constant 0 : index
    %27 = vector.load %arg12[%c0_17, %c0_18] : memref<1x8xf32, #tpu.memory_space<vmem>>, vector<1x8xf32>
    %28 = arith.subf %23, %27 : vector<1x8xf32>
    %c0_19 = arith.constant 0 : index
    %c0_20 = arith.constant 0 : index
    %29 = vector.load %arg13[%c0_19, %c0_20] : memref<1x8xf32, #tpu.memory_space<vmem>>, vector<1x8xf32>
    %30 = arith.addf %29, %28 : vector<1x8xf32>
    %c0_21 = arith.constant 0 : index
    %c0_22 = arith.constant 0 : index
    %31 = vector.load %arg13[%c0_21, %c0_22] : memref<1x8xf32, #tpu.memory_space<vmem>>, vector<1x8xf32>
    tpu.vector_store %arg13[%c0_21, %c0_22], %30 {strides = array<i32>} : memref<1x8xf32, #tpu.memory_space<vmem>>, vector<1x8xf32>,
    %c0_23 = arith.constant 0 : index
    %c0_24 = arith.constant 0 : index
    %32 = vector.load %arg14[%c0_23, %c0_24] : memref<1x8xf32, #tpu.memory_space<vmem>>, vector<1x8xf32>
    %33 = arith.mulf %28, %28 : vector<1x8xf32>
    %34 = arith.addf %32, %33 : vector<1x8xf32>
    %c0_25 = arith.constant 0 : index
    %c0_26 = arith.constant 0 : index
    %35 = vector.load %arg14[%c0_25, %c0_26] : memref<1x8xf32, #tpu.memory_space<vmem>>, vector<1x8xf32>
    tpu.vector_store %arg14[%c0_25, %c0_26], %34 {strides = array<i32>} : memref<1x8xf32, #tpu.memory_space<vmem>>, vector<1x8xf32>,
    %c9_i32 = arith.constant 9 : i32
    %36 = arith.cmpi eq, %arg1, %c9_i32 : i32
    %37 = arith.extui %36 : i1 to i32
    %c0_i32_27 = arith.constant 0 : i32
    %38 = arith.cmpi ne, %37, %c0_i32_27 : i32
    scf.if %38 {
      %c0_28 = arith.constant 0 : index
      %c0_29 = arith.constant 0 : index
      %39 = vector.load %arg13[%c0_28, %c0_29] : memref<1x8xf32, #tpu.memory_space<vmem>>, vector<1x8xf32>
      %cst_30 = arith.constant 1.000000e-01 : f32
      %40 = vector.broadcast %cst_30 : f32 to vector<1x8xf32>
      %41 = arith.mulf %39, %40 : vector<1x8xf32>
      %c0_31 = arith.constant 0 : index
      %c0_32 = arith.constant 0 : index
      %42 = vector.load %arg12[%c0_31, %c0_32] : memref<1x8xf32, #tpu.memory_space<vmem>>, vector<1x8xf32>
      %43 = arith.addf %42, %41 : vector<1x8xf32>
      %c0_33 = arith.constant 0 : index
      %c0_34 = arith.constant 0 : index
      %44 = vector.load %arg14[%c0_33, %c0_34] : memref<1x8xf32, #tpu.memory_space<vmem>>, vector<1x8xf32>
      %cst_35 = arith.constant 1.000000e-01 : f32
      %45 = vector.broadcast %cst_35 : f32 to vector<1x8xf32>
      %46 = arith.mulf %44, %45 : vector<1x8xf32>
      %47 = arith.mulf %41, %41 : vector<1x8xf32>
      %48 = arith.subf %46, %47 : vector<1x8xf32>
      %c0_36 = arith.constant 0 : index
      %c0_37 = arith.constant 0 : index
      %49 = vector.load %arg9[%c0_36, %c0_37] : memref<2x8xf32, #tpu.memory_space<vmem>>, vector<1x8xf32>
      tpu.vector_store %arg9[%c0_36, %c0_37], %43 {strides = array<i32>} : memref<2x8xf32, #tpu.memory_space<vmem>>, vector<1x8xf32>,
      %cst_38 = arith.constant 0.000000e+00 : f32
      %50 = vector.broadcast %cst_38 : f32 to vector<1x8xf32>
      %51 = arith.maximumf %48, %50 : vector<1x8xf32>
      %52 = math.sqrt %51 : vector<1x8xf32>
      %c1 = arith.constant 1 : index
      %c0_39 = arith.constant 0 : index
      %53 = vector.load %arg9[%c1, %c0_39] : memref<2x8xf32, #tpu.memory_space<vmem>>, vector<1x8xf32>
      tpu.vector_store %arg9[%c1, %c0_39], %52 {strides = array<i32>} : memref<2x8xf32, #tpu.memory_space<vmem>>, vector<1x8xf32>,
    } else {
    }
    return
  }
  func.func @transform_0(%arg0: i32, %arg1: i32, %arg2: memref<10xf32, #tpu.memory_space<smem>>) -> (i32, i32) {
    %c0_i32 = arith.constant 0 : i32
    %c0_i32_0 = arith.constant 0 : i32
    return %c0_i32, %arg0 : i32, i32
  }
  func.func @transform_1(%arg0: i32, %arg1: i32, %arg2: memref<10xf32, #tpu.memory_space<smem>>) -> (i32, i32) {
    %c0_i32 = arith.constant 0 : i32
    %c0_i32_0 = arith.constant 0 : i32
    %c0_i32_1 = arith.constant 0 : i32
    return %c0_i32, %c0_i32_0 : i32, i32
  }
  func.func @transform_2(%arg0: i32, %arg1: i32, %arg2: memref<10xf32, #tpu.memory_space<smem>>) -> (i32, i32) {
    %c0_i32 = arith.constant 0 : i32
    %c0_i32_0 = arith.constant 0 : i32
    %c0_i32_1 = arith.constant 0 : i32
    return %c0_i32, %c0_i32_0 : i32, i32
  }
  func.func @transform_3(%arg0: i32, %arg1: i32, %arg2: memref<10xf32, #tpu.memory_space<smem>>) -> (i32, i32) {
    %c0_i32 = arith.constant 0 : i32
    %c0_i32_0 = arith.constant 0 : i32
    %c0_i32_1 = arith.constant 0 : i32
    return %c0_i32, %c0_i32_0 : i32, i32
  }
  func.func @transform_4(%arg0: i32, %arg1: i32, %arg2: memref<10xf32, #tpu.memory_space<smem>>) -> (i32, i32, i32) {
    %c0_i32 = arith.constant 0 : i32
    %c0_i32_0 = arith.constant 0 : i32
    %c0_i32_1 = arith.constant 0 : i32
    return %arg1, %c0_i32, %c0_i32_0 : i32, i32, i32
  }
  func.func @transform_5(%arg0: i32, %arg1: i32, %arg2: memref<10xf32, #tpu.memory_space<smem>>) -> (i32, i32, i32) {
    %c0_i32 = arith.constant 0 : i32
    %c0_i32_0 = arith.constant 0 : i32
    %c0_i32_1 = arith.constant 0 : i32
    return %arg1, %c0_i32, %c0_i32_0 : i32, i32, i32
  }
  func.func @transform_6(%arg0: i32, %arg1: i32, %arg2: memref<10xf32, #tpu.memory_space<smem>>) -> (i32, i32) {
    %c0_i32 = arith.constant 0 : i32
    %c0_i32_0 = arith.constant 0 : i32
    return %c0_i32, %arg0 : i32, i32
  }
}

</mosaic_0001>

<llo_original>
// kernel: kfac_forward.1
$region0: #{kfac_forward.1}
  #allocation0 [shape = 'u32[]', space=smem, size = 0x4, offset = 0x4, fixed_abs, tag = 'smem constant byte address 0x4 - core index']
  #allocation1 [shape = 'u32[144,128]{1,0:T(1,128)}', space=vmem, size = 0x12000, scoped, tag = 'internal scratch']
  #allocation2 [shape = 'f32[32,8]{1,0:T(8,128)}', space=vmem, size = 0x4000, scoped, tag = 'scratch operand']
  #allocation3 [shape = 'bf16[128,8]{1,0:T(16,128)(2,1)}', space=vmem, size = 0x8000, scoped, tag = 'scratch operand']
  #allocation4 [shape = 'f32[1,8]{1,0:T(1,128)}', space=vmem, size = 0x200, scoped, tag = 'scratch operand']
  #allocation5 [shape = 'f32[1,8]{1,0:T(1,128)}', space=vmem, size = 0x200, scoped, tag = 'scratch operand']
  #allocation6 [shape = 'f32[1,8]{1,0:T(1,128)}', space=vmem, size = 0x200, scoped, tag = 'scratch operand']
  #allocation7 [shape = 's32[1]{0}', space=sflag, size = 0x4, scoped, tag = 'scoped memory for kfac_forward.1']
  #allocation8 [shape = 'u8[512]{0}', space=smem, size = 0x200, scoped, tag = 'prefetched SMEM operand 0']
  %s0 = inlined_call_operand.vmem [shape: f32[10], index: 0, kind: input, shape index: {}]
  %s1 = inlined_call_operand.vmem [shape: bf16[128,8], index: 1, kind: input, shape index: {}]
  %s2 = inlined_call_operand.vmem [shape: bf16[32,128], index: 2, kind: input, shape index: {}]
  %s3 = inlined_call_operand.vmem [shape: bf16[128,128], index: 3, kind: input, shape index: {}]
  %s4 = inlined_call_operand.vmem [shape: bf16[32,32], index: 4, kind: input, shape index: {}]
  %s5 = inlined_call_operand.vmem [shape: bf16[10,32,128], index: 5, kind: input, shape index: {}]
  %s6 = inlined_call_operand.vmem [shape: f32[10,32,1], index: 6, kind: input, shape index: {}]
  %s7 = inlined_call_operand.vmem [shape: f32[2,8], index: 7, kind: output, shape index: {}]
  %s8 = sld [smem:[#allocation0]]
  $region69: #{kfac_forward.1} parent=0
    _
  %s10 = ssub.s32 1, %s8
  %s11 = scalar_select 0, %s10, %s8
  %s12 = sshll.u32 %s0, 4
  %s13 = int_to_ptr.vmem [resolvable:$true] %s12
  %15 = dma.vmem_to_smem %s13, 16, [#allocation8], [#allocation7]
  %16 = dma.done [#allocation7], 16
  %17 = sfence
  loop: start=0, step=1, limit=12
  $region2: #{kfac_forward.1} parent=0 // loop_pre_header
    _
  $region3: #{kfac_forward.1} parent=0 // loop_header
    %s19 = sphi 0, %s23
    %p20 = scmp.ge.s32.totalorder %s19, 12
    %s26 = sphi 0, %s38
    %s27 = sphi 0, %s34
    %s28 = sphi 0, %s26
    %s29 = sphi 0, %s27
    %s30 = sphi 0, %s28
    %s31 = sphi 0, %s29
    %s41 = sphi 0, %s43
    %s44 = sphi 0, %s41
    %s45 = sphi 0, %s44
    %s61 = sphi 0, %s45
    %s65 = sphi 0, %s65
    %s67 = sphi 0, %s65
    %s68 = sphi 0, %s67
    %s82 = sphi 0, %s68
    %s86 = sphi 0, %s86
    %s88 = sphi 0, %s86
    %s89 = sphi 0, %s88
    %s103 = sphi 0, %s89
    %s107 = sphi 0, %s107
    %s109 = sphi 0, %s107
    %s110 = sphi 0, %s109
    %s124 = sphi 0, %s110
    %s130 = sphi 0, %s132
    %s133 = sphi 0, %s130
    %s134 = sphi 0, %s133
    %s150 = sphi 0, %s134
    %s156 = sphi 0, %s158
    %s159 = sphi 0, %s156
    %s160 = sphi 0, %s159
    %s176 = sphi 0, %s160
    %s182 = sphi 0, %s184
    %s185 = sphi 0, %s182
    %s186 = sphi 0, %s185
    %s202 = sphi 0, %s186
  $region4: #{kfac_forward.1} parent=0 // loop_header_branch
    %22 = sbr.rel (%p20) target = $region8
  $region5: #{kfac_forward.1} parent=0 // loop_body
    %s24 = ssub.s32 %s19, 1
    %s25 = ssub.s32 %s19, 2
    %s32 = sadd.s32 1, %s27
    %p33 = scmp.ge.s32.totalorder %s32, 10
    %s34 = scalar_select %p33, 0, %s32
    %s35 = sadd.s32 1, %s26
    %s36 = scalar_select %p33, %s35, %s26
    %p37 = scmp.ge.s32.totalorder %s36, 1
    %s38 = scalar_select %p37, 0, %s36
    %s39 = ssub.s32 %s26, %s38
    %p40 = scmp.eq.s32.totalorder %s39, 0
    %s42 = sadd.s32 %s41, 1
    %s43 = scalar_select %p40, %s41, %s42
    %p46 = pneg %p40
    %p47 = scmp.eq.s32.totalorder %s19, 9
    %p48 = por %p46, %p47
    %p49 = scmp.ne.s32.totalorder %s41, %s44
    %p50 = scmp.eq.s32.totalorder %s19, 0
    %p51 = por %p49, %p50
    %p52 = scmp.ne.s32.totalorder %s41, %s44
    %p53 = scmp.eq.s32.totalorder %s24, 9
    %p54 = por %p52, %p53
    %p55 = scmp.ne.s32.totalorder %s44, %s45
    %p56 = scmp.eq.s32.totalorder %s24, 0
    %p57 = por %p55, %p56
    %p58 = scmp.ne.s32.totalorder %s44, %s45
    %p59 = scmp.eq.s32.totalorder %s25, 9
    %p60 = por %p58, %p59
    %p62 = scmp.ne.s32.totalorder %s45, %s61
    %p63 = scmp.eq.s32.totalorder %s25, 0
    %p64 = por %p62, %p63
    %s66 = sadd.s32 %s65, 1
    %p69 = scmp.eq.s32.totalorder %s19, 9
    %p70 = scmp.ne.s32.totalorder %s65, %s67
    %p71 = scmp.eq.s32.totalorder %s19, 0
    %p72 = por %p70, %p71
    %p73 = scmp.ne.s32.totalorder %s65, %s67
    %p74 = scmp.eq.s32.totalorder %s24, 9
    %p75 = por %p73, %p74
    %p76 = scmp.ne.s32.totalorder %s67, %s68
    %p77 = scmp.eq.s32.totalorder %s24, 0
    %p78 = por %p76, %p77
    %p79 = scmp.ne.s32.totalorder %s67, %s68
    %p80 = scmp.eq.s32.totalorder %s25, 9
    %p81 = por %p79, %p80
    %p83 = scmp.ne.s32.totalorder %s68, %s82
    %p84 = scmp.eq.s32.totalorder %s25, 0
    %p85 = por %p83, %p84
    %s87 = sadd.s32 %s86, 1
    %p90 = scmp.eq.s32.totalorder %s19, 9
    %p91 = scmp.ne.s32.totalorder %s86, %s88
    %p92 = scmp.eq.s32.totalorder %s19, 0
    %p93 = por %p91, %p92
    %p94 = scmp.ne.s32.totalorder %s86, %s88
    %p95 = scmp.eq.s32.totalorder %s24, 9
    %p96 = por %p94, %p95
    %p97 = scmp.ne.s32.totalorder %s88, %s89
    %p98 = scmp.eq.s32.totalorder %s24, 0
    %p99 = por %p97, %p98
    %p100 = scmp.ne.s32.totalorder %s88, %s89
    %p101 = scmp.eq.s32.totalorder %s25, 9
    %p102 = por %p100, %p101
    %p104 = scmp.ne.s32.totalorder %s89, %s103
    %p105 = scmp.eq.s32.totalorder %s25, 0
    %p106 = por %p104, %p105
    %s108 = sadd.s32 %s107, 1
    %p111 = scmp.eq.s32.totalorder %s19, 9
    %p112 = scmp.ne.s32.totalorder %s107, %s109
    %p113 = scmp.eq.s32.totalorder %s19, 0
    %p114 = por %p112, %p113
    %p115 = scmp.ne.s32.totalorder %s107, %s109
    %p116 = scmp.eq.s32.totalorder %s24, 9
    %p117 = por %p115, %p116
    %p118 = scmp.ne.s32.totalorder %s109, %s110
    %p119 = scmp.eq.s32.totalorder %s24, 0
    %p120 = por %p118, %p119
    %p121 = scmp.ne.s32.totalorder %s109, %s110
    %p122 = scmp.eq.s32.totalorder %s25, 9
    %p123 = por %p121, %p122
    %p125 = scmp.ne.s32.totalorder %s110, %s124
    %p126 = scmp.eq.s32.totalorder %s25, 0
    %p127 = por %p125, %p126
    %s128 = ssub.s32 %s27, %s34
    %p129 = scmp.eq.s32.totalorder %s128, 0
    %s131 = sadd.s32 %s130, 1
    %s132 = scalar_select %p129, %s130, %s131
    %p135 = pneg %p129
    %p136 = scmp.eq.s32.totalorder %s19, 9
    %p137 = por %p135, %p136
    %p138 = scmp.ne.s32.totalorder %s130, %s133
    %p139 = scmp.eq.s32.totalorder %s19, 0
    %p140 = por %p138, %p139
    %p141 = scmp.ne.s32.totalorder %s130, %s133
    %p142 = scmp.eq.s32.totalorder %s24, 9
    %p143 = por %p141, %p142
    %p144 = scmp.ne.s32.totalorder %s133, %s134
    %p145 = scmp.eq.s32.totalorder %s24, 0
    %p146 = por %p144, %p145
    %p147 = scmp.ne.s32.totalorder %s133, %s134
    %p148 = scmp.eq.s32.totalorder %s25, 9
    %p149 = por %p147, %p148
    %p151 = scmp.ne.s32.totalorder %s134, %s150
    %p152 = scmp.eq.s32.totalorder %s25, 0
    %p153 = por %p151, %p152
    %s154 = ssub.s32 %s27, %s34
    %p155 = scmp.eq.s32.totalorder %s154, 0
    %s157 = sadd.s32 %s156, 1
    %s158 = scalar_select %p155, %s156, %s157
    %p161 = pneg %p155
    %p162 = scmp.eq.s32.totalorder %s19, 9
    %p163 = por %p161, %p162
    %p164 = scmp.ne.s32.totalorder %s156, %s159
    %p165 = scmp.eq.s32.totalorder %s19, 0
    %p166 = por %p164, %p165
    %p167 = scmp.ne.s32.totalorder %s156, %s159
    %p168 = scmp.eq.s32.totalorder %s24, 9
    %p169 = por %p167, %p168
    %p170 = scmp.ne.s32.totalorder %s159, %s160
    %p171 = scmp.eq.s32.totalorder %s24, 0
    %p172 = por %p170, %p171
    %p173 = scmp.ne.s32.totalorder %s159, %s160
    %p174 = scmp.eq.s32.totalorder %s25, 9
    %p175 = por %p173, %p174
    %p177 = scmp.ne.s32.totalorder %s160, %s176
    %p178 = scmp.eq.s32.totalorder %s25, 0
    %p179 = por %p177, %p178
    %s180 = ssub.s32 %s26, %s38
    %p181 = scmp.eq.s32.totalorder %s180, 0
    %s183 = sadd.s32 %s182, 1
    %s184 = scalar_select %p181, %s182, %s183
    %p187 = pneg %p181
    %p188 = scmp.eq.s32.totalorder %s19, 9
    %p189 = por %p187, %p188
    %p190 = scmp.ne.s32.totalorder %s182, %s185
    %p191 = scmp.eq.s32.totalorder %s19, 0
    %p192 = por %p190, %p191
    %p193 = scmp.ne.s32.totalorder %s182, %s185
    %p194 = scmp.eq.s32.totalorder %s24, 9
    %p195 = por %p193, %p194
    %p196 = scmp.ne.s32.totalorder %s185, %s186
    %p197 = scmp.eq.s32.totalorder %s24, 0
    %p198 = por %p196, %p197
    %p199 = scmp.ne.s32.totalorder %s185, %s186
    %p200 = scmp.eq.s32.totalorder %s25, 9
    %p201 = por %p199, %p200
    %p203 = scmp.ne.s32.totalorder %s186, %s202
    %p204 = scmp.eq.s32.totalorder %s25, 0
    %p205 = por %p203, %p204
    %p206 = scmp.le.s32.totalorder 1, %s19
    %p207 = scmp.lt.s32.totalorder %s19, 11
    %p208 = pnand %p206, %p207
    %p209 = pneg %p208
    // Predicated region
    $region9: #{kfac_forward.1} parent=5 // pred_check
      _
    $region10: #{kfac_forward.1} parent=5 // pred_check_branch
      %211 = sbr.rel (%p208) target = $region12
    $region11: #{kfac_forward.1} parent=5 // pred_region
      %s212 = ssub.s32 %s19, 1
      // Predicated region
      $region13: #{kfac_forward.1} parent=11 // pred_check
        %p213 = pneg %p57
      $region14: #{kfac_forward.1} parent=11 // pred_check_branch
        %215 = sbr.rel (%p213) target = $region16
      $region15: #{kfac_forward.1} parent=11 // pred_region
        %p216 = scmp.lt.s32.totalorder %s28, 0
        %s217 = scalar_select %p216, %s28, 0
        %s218 = smul.addr %s217, 4
        %s219 = scalar_lea.vmem %s1, %s218
      $region16: #{kfac_forward.1} parent=11 // pred_fallthru
        _
      // Predicated region
      $region17: #{kfac_forward.1} parent=11 // pred_check
        %p220 = pneg %p78
      $region18: #{kfac_forward.1} parent=11 // pred_check_branch
        %222 = sbr.rel (%p220) target = $region20
      $region19: #{kfac_forward.1} parent=11 // pred_region
        _
      $region20: #{kfac_forward.1} parent=11 // pred_fallthru
        _
      // Predicated region
      $region21: #{kfac_forward.1} parent=11 // pred_check
        %p223 = pneg %p99
      $region22: #{kfac_forward.1} parent=11 // pred_check_branch
        %225 = sbr.rel (%p223) target = $region24
      $region23: #{kfac_forward.1} parent=11 // pred_region
        _
      $region24: #{kfac_forward.1} parent=11 // pred_fallthru
        _
      // Predicated region
      $region25: #{kfac_forward.1} parent=11 // pred_check
        %p226 = pneg %p120
      $region26: #{kfac_forward.1} parent=11 // pred_check_branch
        %228 = sbr.rel (%p226) target = $region28
      $region27: #{kfac_forward.1} parent=11 // pred_region
        _
      $region28: #{kfac_forward.1} parent=11 // pred_fallthru
        _
    $region12: #{kfac_forward.1} parent=5 // pred_fallthru
      _
    %p229 = scmp.lt.s32.totalorder %s19, 10
    // Predicated region
    $region29: #{kfac_forward.1} parent=5 // pred_check
      %p230 = pneg %p229
    $region30: #{kfac_forward.1} parent=5 // pred_check_branch
      %232 = sbr.rel (%p230) target = $region32
    $region31: #{kfac_forward.1} parent=5 // pred_region
      // Predicated region
      $region33: #{kfac_forward.1} parent=31 // pred_check
        %p233 = pneg %p140
      $region34: #{kfac_forward.1} parent=31 // pred_check_branch
        %235 = sbr.rel (%p233) target = $region36
      $region35: #{kfac_forward.1} parent=31 // pred_region
        %p236 = scmp.lt.s32.totalorder %s27, 9
        %s237 = scalar_select %p236, %s27, 9
        %s238 = smul.addr %s237, 4
        %s239 = smul.addr %s238, 4
        %s240 = scalar_lea.vmem %s5, %s239
      $region36: #{kfac_forward.1} parent=31 // pred_fallthru
        _
      // Predicated region
      $region37: #{kfac_forward.1} parent=31 // pred_check
        %p241 = pneg %p166
      $region38: #{kfac_forward.1} parent=31 // pred_check_branch
        %243 = sbr.rel (%p241) target = $region40
      $region39: #{kfac_forward.1} parent=31 // pred_region
        %p244 = scmp.lt.s32.totalorder %s27, 9
        %s245 = scalar_select %p244, %s27, 9
        %s246 = smul.addr %s245, 4
        %s247 = smul.addr %s246, 8
        %s248 = scalar_lea.vmem %s6, %s247
      $region40: #{kfac_forward.1} parent=31 // pred_fallthru
        _
    $region32: #{kfac_forward.1} parent=5 // pred_fallthru
      _
    %p249 = scmp.le.s32.totalorder 1, %s19
    %p250 = scmp.lt.s32.totalorder %s19, 11
    %p251 = pnand %p249, %p250
    %p252 = pneg %p251
    // Predicated region
    $region41: #{kfac_forward.1} parent=5 // pred_check
      _
    $region42: #{kfac_forward.1} parent=5 // pred_check_branch
      %254 = sbr.rel (%p251) target = $region44
    $region43: #{kfac_forward.1} parent=5 // pred_region
      %s255 = ssub.s32 %s19, 1
      %p256 = scmp.lt.s32.totalorder %s28, 0
      %s257 = scalar_select %p256, %s28, 0
      %s258 = smul.addr %s257, 4
      %s259 = scalar_lea.vmem %s1, %s258
      %p260 = pneg %p57
      %p261 = pneg %p54
      %p262 = pneg %p78
      %p263 = pneg %p75
      %p264 = pneg %p99
      %p265 = pneg %p96
      %p266 = pneg %p120
      %p267 = pneg %p117
      %p268 = scmp.lt.s32.totalorder %s29, 9
      %s269 = scalar_select %p268, %s29, 9
      %s270 = smul.addr %s269, 4
      %s271 = smul.addr %s270, 4
      %s272 = scalar_lea.vmem %s5, %s271
      %p273 = pneg %p146
      %p274 = pneg %p143
      %p275 = scmp.lt.s32.totalorder %s29, 9
      %s276 = scalar_select %p275, %s29, 9
      %s277 = smul.addr %s276, 4
      %s278 = smul.addr %s277, 8
      %s279 = scalar_lea.vmem %s6, %s278
      %p280 = pneg %p172
      %p281 = pneg %p169
      %p282 = pneg %p198
      %p283 = pneg %p195
      %p284 = scmp.lt.s32.totalorder %s28, 0
      %s285 = scalar_select %p284, %s28, 0
      %s286 = smul.addr %s285, 2
      %s287 = scalar_lea.vmem %s7, %s286
      %p288 = scmp.lt.s32.totalorder %s28, 0
      %s289 = scalar_select %p288, %s28, 0
      %s290 = smul.addr %s289, 4
      %s291 = scalar_lea.vmem %s1, %s290
      %p292 = scmp.lt.s32.totalorder %s29, 9
      %s293 = scalar_select %p292, %s29, 9
      %s294 = smul.addr %s293, 4
      %s295 = smul.addr %s294, 4
      %s296 = scalar_lea.vmem %s5, %s295
      %p297 = scmp.lt.s32.totalorder %s29, 9
      %s298 = scalar_select %p297, %s29, 9
      %s299 = smul.addr %s298, 4
      %s300 = smul.addr %s299, 8
      %s301 = scalar_lea.vmem %s6, %s300
      %p302 = scmp.lt.s32.totalorder %s28, 0
      %s303 = scalar_select %p302, %s28, 0
      %s304 = smul.addr %s303, 2
      %s305 = scalar_lea.vmem %s7, %s304
      %p307 = scmp.eq.s32.totalorder %s29, 0
      // Predicated region
      $region45: #{kfac_forward.1} parent=43 // pred_check
        %p308 = pneg %p307
      $region46: #{kfac_forward.1} parent=43 // pred_check_branch
        %310 = sbr.rel (%p308) target = $region48
      $region47: #{kfac_forward.1} parent=43 // pred_region
        %v311 = vld [vmem:[%s291] sm:$0xf]
        %v312 = vld [vmem:[%s291 + $0x4] sm:$0xf]
        %v313 = vld [vmem:[%s291 + $0x8] sm:$0xf]
        %v314 = vld [vmem:[%s291 + $0xc] sm:$0xf]
        %v315 = vld [vmem:[%s291 + $0x10] sm:$0xf]
        %v316 = vld [vmem:[%s291 + $0x14] sm:$0xf]
        %v317 = vld [vmem:[%s291 + $0x18] sm:$0xf]
        %v318 = vld [vmem:[%s291 + $0x1c] sm:$0xf]
        %v319 = vld [vmem:[%s291 + $0x20] sm:$0xf]
        %v320 = vld [vmem:[%s291 + $0x24] sm:$0xf]
        %v321 = vld [vmem:[%s291 + $0x28] sm:$0xf]
        %v322 = vld [vmem:[%s291 + $0x2c] sm:$0xf]
        %v323 = vld [vmem:[%s291 + $0x30] sm:$0xf]
        %v324 = vld [vmem:[%s291 + $0x34] sm:$0xf]
        %v325 = vld [vmem:[%s291 + $0x38] sm:$0xf]
        %v326 = vld [vmem:[%s291 + $0x3c] sm:$0xf]
        %v327 = vld [vmem:[%s2] sm:$0xf]
        %v328 = vld [vmem:[%s2 + $0x4] sm:$0xf]
        %v329 = vld [vmem:[%s2 + $0x8] sm:$0xf]
        %v330 = vld [vmem:[%s2 + $0xc] sm:$0xf]
        %v335 = vunpack.c.l.b16 %v327
        %v336 = vunpack.c.l.b16 %v328
        %v337 = vunpack.c.l.b16 %v329
        %v338 = vunpack.c.l.b16 %v330
        %v339 = vpack.c.b16 %v336, %v335
        %v340 = vpack.c.b16 %v338, %v337
        %v359 = vunpack.c.l.b16 %v311
        %v360 = vunpack.c.l.b16 %v312
        %v361 = vunpack.c.l.b16 %v313
        %v362 = vunpack.c.l.b16 %v314
        %v363 = vunpack.c.l.b16 %v315
        %v364 = vunpack.c.l.b16 %v316
        %v365 = vunpack.c.l.b16 %v317
        %v366 = vunpack.c.l.b16 %v318
        %v367 = vunpack.c.l.b16 %v319
        %v368 = vunpack.c.l.b16 %v320
        %v369 = vunpack.c.l.b16 %v321
        %v370 = vunpack.c.l.b16 %v322
        %v371 = vunpack.c.l.b16 %v323
        %v372 = vunpack.c.l.b16 %v324
        %v373 = vunpack.c.l.b16 %v325
        %v374 = vunpack.c.l.b16 %v326
        %v375 = vpack.c.b16 %v360, %v359
        %v376 = vpack.c.b16 %v362, %v361
        %v377 = vpack.c.b16 %v364, %v363
        %v378 = vpack.c.b16 %v366, %v365
        %v379 = vpack.c.b16 %v368, %v367
        %v380 = vpack.c.b16 %v370, %v369
        %v381 = vpack.c.b16 %v372, %v371
        %v382 = vpack.c.b16 %v374, %v373
        %391 = vmatprep.subr.bf16.mxu0 0
        %392 = vmatpush1.bf16.msra.mxu0 %v375
        %393 = vmatprep.subr.bf16.mxu0 0
        %394 = vmatpush1.bf16.msra.mxu0 %v376
        %395 = vmatprep.subr.bf16.mxu0 0
        %396 = vmatpush1.bf16.msra.mxu0 %v377
        %397 = vmatprep.subr.bf16.mxu0 0
        %398 = vmatpush1.bf16.msra.mxu0 %v378
        %399 = vmatprep.subr.bf16.mxu0 0
        %400 = vmatpush1.bf16.msra.mxu0 %v379
        %401 = vmatprep.subr.bf16.mxu0 0
        %402 = vmatpush1.bf16.msra.mxu0 %v380
        %403 = vmatprep.subr.bf16.mxu0 0
        %404 = vmatpush1.bf16.msra.mxu0 %v381
        %405 = vmatprep.subr.bf16.mxu0 0
        %406 = vmatpush1.bf16.msra.mxu0 %v382
        %407 = vmatprep.subr.bf16.mxu0 0
        %408 = vmatpush1.bf16.msra.mxu0 0
        %409 = vmatprep.subr.bf16.mxu0 0
        %410 = vmatpush1.bf16.msra.mxu0 0
        %411 = vmatprep.subr.bf16.mxu0 0
        %412 = vmatpush1.bf16.msra.mxu0 0
        %413 = vmatprep.subr.bf16.mxu0 0
        %414 = vmatpush1.bf16.msra.mxu0 0
        %415 = vmatprep.subr.bf16.mxu0 0
        %416 = vmatpush1.bf16.msra.mxu0 0
        %417 = vmatprep.subr.bf16.mxu0 0
        %418 = vmatpush1.bf16.msra.mxu0 0
        %419 = vmatprep.subr.bf16.mxu0 0
        %420 = vmatpush1.bf16.msra.mxu0 0
        %421 = vmatprep.subr.bf16.mxu0 0
        %422 = vmatpush1.bf16.msra.mxu0 0
        %423 = vmatprep.mubr.bf16.mxu0 0
        %424 = vmatmul.mubr.bf16.gmra.mrb[0].mxu0 %v339
        %v425 = vpop.f32.mrb[0].mxu0
        %v426 = vadd.f32 0.0, %v425
        %v427 = vpop.f32.mrb[0].mxu0
        %v428 = vpop.f32.mrb[0].mxu0
        %v429 = vadd.f32 0.0, %v428
        %v430 = vpop.f32.mrb[0].mxu0
        %431 = vmatprep.mubr.bf16.mxu0 0
        %432 = vmatmul.mubr.bf16.gmra.mrb[0].mxu0 %v340
        %v433 = vpop.f32.mrb[0].mxu0
        %v434 = vadd.f32 0.0, %v433
        %v435 = vpop.f32.mrb[0].mxu0
        %v436 = vpop.f32.mrb[0].mxu0
        %v437 = vadd.f32 0.0, %v436
        %v438 = vpop.f32.mrb[0].mxu0
        %439 = vdwg.mxu0
        %vm440 = vcmask 64512
        %441 = vst.msk [vmem:[#allocation2] sm:$0xff] %vm440, %v426
        %442 = vst.msk [vmem:[#allocation2 + $0x8] sm:$0xff] %vm440, %v429
        %443 = vst.msk [vmem:[#allocation2 + $0x10] sm:$0xff] %vm440, %v434
        %444 = vst.msk [vmem:[#allocation2 + $0x18] sm:$0xff] %vm440, %v437
        %v445 = vld [vmem:[%s3] sm:$0xf]
        %v446 = vld [vmem:[%s3 + $0x4] sm:$0xf]
        %v447 = vld [vmem:[%s3 + $0x8] sm:$0xf]
        %v448 = vld [vmem:[%s3 + $0xc] sm:$0xf]
        %v449 = vld [vmem:[%s3 + $0x10] sm:$0xf]
        %v450 = vld [vmem:[%s3 + $0x14] sm:$0xf]
        %v451 = vld [vmem:[%s3 + $0x18] sm:$0xf]
        %v452 = vld [vmem:[%s3 + $0x1c] sm:$0xf]
        %v453 = vld [vmem:[%s3 + $0x20] sm:$0xf]
        %v454 = vld [vmem:[%s3 + $0x24] sm:$0xf]
        %v455 = vld [vmem:[%s3 + $0x28] sm:$0xf]
        %v456 = vld [vmem:[%s3 + $0x2c] sm:$0xf]
        %v457 = vld [vmem:[%s3 + $0x30] sm:$0xf]
        %v458 = vld [vmem:[%s3 + $0x34] sm:$0xf]
        %v459 = vld [vmem:[%s3 + $0x38] sm:$0xf]
        %v460 = vld [vmem:[%s3 + $0x3c] sm:$0xf]
        %v477 = vunpack.c.l.b16 %v445
        %v478 = vunpack.c.l.b16 %v446
        %v479 = vunpack.c.l.b16 %v447
        %v480 = vunpack.c.l.b16 %v448
        %v481 = vunpack.c.l.b16 %v449
        %v482 = vunpack.c.l.b16 %v450
        %v483 = vunpack.c.l.b16 %v451
        %v484 = vunpack.c.l.b16 %v452
        %v485 = vunpack.c.l.b16 %v453
        %v486 = vunpack.c.l.b16 %v454
        %v487 = vunpack.c.l.b16 %v455
        %v488 = vunpack.c.l.b16 %v456
        %v489 = vunpack.c.l.b16 %v457
        %v490 = vunpack.c.l.b16 %v458
        %v491 = vunpack.c.l.b16 %v459
        %v492 = vunpack.c.l.b16 %v460
        %v493 = vpack.c.b16 %v478, %v477
        %v494 = vpack.c.b16 %v480, %v479
        %v495 = vpack.c.b16 %v482, %v481
        %v496 = vpack.c.b16 %v484, %v483
        %v497 = vpack.c.b16 %v486, %v485
        %v498 = vpack.c.b16 %v488, %v487
        %v499 = vpack.c.b16 %v490, %v489
        %v500 = vpack.c.b16 %v492, %v491
        %509 = vmatprep.subr.bf16.mxu0 0
        %510 = vmatpush1.bf16.msra.mxu0 %v375
        %511 = vmatprep.subr.bf16.mxu0 0
        %512 = vmatpush1.bf16.msra.mxu0 %v376
        %513 = vmatprep.subr.bf16.mxu0 0
        %514 = vmatpush1.bf16.msra.mxu0 %v377
        %515 = vmatprep.subr.bf16.mxu0 0
        %516 = vmatpush1.bf16.msra.mxu0 %v378
        %517 = vmatprep.subr.bf16.mxu0 0
        %518 = vmatpush1.bf16.msra.mxu0 %v379
        %519 = vmatprep.subr.bf16.mxu0 0
        %520 = vmatpush1.bf16.msra.mxu0 %v380
        %521 = vmatprep.subr.bf16.mxu0 0
        %522 = vmatpush1.bf16.msra.mxu0 %v381
        %523 = vmatprep.subr.bf16.mxu0 0
        %524 = vmatpush1.bf16.msra.mxu0 %v382
        %525 = vmatprep.subr.bf16.mxu0 0
        %526 = vmatpush1.bf16.msra.mxu0 0
        %527 = vmatprep.subr.bf16.mxu0 0
        %528 = vmatpush1.bf16.msra.mxu0 0
        %529 = vmatprep.subr.bf16.mxu0 0
        %530 = vmatpush1.bf16.msra.mxu0 0
        %531 = vmatprep.subr.bf16.mxu0 0
        %532 = vmatpush1.bf16.msra.mxu0 0
        %533 = vmatprep.subr.bf16.mxu0 0
        %534 = vmatpush1.bf16.msra.mxu0 0
        %535 = vmatprep.subr.bf16.mxu0 0
        %536 = vmatpush1.bf16.msra.mxu0 0
        %537 = vmatprep.subr.bf16.mxu0 0
        %538 = vmatpush1.bf16.msra.mxu0 0
        %539 = vmatprep.subr.bf16.mxu0 0
        %540 = vmatpush1.bf16.msra.mxu0 0
        %541 = vmatprep.mubr.bf16.mxu0 0
        %542 = vmatmul.mubr.bf16.gmra.mrb[0].mxu0 %v493
        %v543 = vpop.f32.mrb[0].mxu0
        %v544 = vadd.f32 0.0, %v543
        %v545 = vpop.f32.mrb[0].mxu0
        %v546 = vpop.f32.mrb[0].mxu0
        %v547 = vadd.f32 0.0, %v546
        %v548 = vpop.f32.mrb[0].mxu0
        %549 = vmatprep.mubr.bf16.mxu0 0
        %550 = vmatmul.mubr.bf16.gmra.mrb[0].mxu0 %v494
        %v551 = vpop.f32.mrb[0].mxu0
        %v552 = vadd.f32 0.0, %v551
        %v553 = vpop.f32.mrb[0].mxu0
        %v554 = vpop.f32.mrb[0].mxu0
        %v555 = vadd.f32 0.0, %v554
        %v556 = vpop.f32.mrb[0].mxu0
        %557 = vmatprep.mubr.bf16.mxu0 0
        %558 = vmatmul.mubr.bf16.gmra.mrb[0].mxu0 %v495
        %v559 = vpop.f32.mrb[0].mxu0
        %v560 = vadd.f32 0.0, %v559
        %v561 = vpop.f32.mrb[0].mxu0
        %v562 = vpop.f32.mrb[0].mxu0
        %v563 = vadd.f32 0.0, %v562
        %v564 = vpop.f32.mrb[0].mxu0
        %565 = vmatprep.mubr.bf16.mxu0 0
        %566 = vmatmul.mubr.bf16.gmra.mrb[0].mxu0 %v496
        %v567 = vpop.f32.mrb[0].mxu0
        %v568 = vadd.f32 0.0, %v567
        %v569 = vpop.f32.mrb[0].mxu0
        %v570 = vpop.f32.mrb[0].mxu0
        %v571 = vadd.f32 0.0, %v570
        %v572 = vpop.f32.mrb[0].mxu0
        %573 = vmatprep.mubr.bf16.mxu0 0
        %574 = vmatmul.mubr.bf16.gmra.mrb[0].mxu0 %v497
        %v575 = vpop.f32.mrb[0].mxu0
        %v576 = vadd.f32 0.0, %v575
        %v577 = vpop.f32.mrb[0].mxu0
        %v578 = vpop.f32.mrb[0].mxu0
        %v579 = vadd.f32 0.0, %v578
        %v580 = vpop.f32.mrb[0].mxu0
        %581 = vmatprep.mubr.bf16.mxu0 0
        %582 = vmatmul.mubr.bf16.gmra.mrb[0].mxu0 %v498
        %v583 = vpop.f32.mrb[0].mxu0
        %v584 = vadd.f32 0.0, %v583
        %v585 = vpop.f32.mrb[0].mxu0
        %v586 = vpop.f32.mrb[0].mxu0
        %v587 = vadd.f32 0.0, %v586
        %v588 = vpop.f32.mrb[0].mxu0
        %589 = vmatprep.mubr.bf16.mxu0 0
        %590 = vmatmul.mubr.bf16.gmra.mrb[0].mxu0 %v499
        %v591 = vpop.f32.mrb[0].mxu0
        %v592 = vadd.f32 0.0, %v591
        %v593 = vpop.f32.mrb[0].mxu0
        %v594 = vpop.f32.mrb[0].mxu0
        %v595 = vadd.f32 0.0, %v594
        %v596 = vpop.f32.mrb[0].mxu0
        %597 = vmatprep.mubr.bf16.mxu0 0
        %598 = vmatmul.mubr.bf16.gmra.mrb[0].mxu0 %v500
        %v599 = vpop.f32.mrb[0].mxu0
        %v600 = vadd.f32 0.0, %v599
        %v601 = vpop.f32.mrb[0].mxu0
        %v602 = vpop.f32.mrb[0].mxu0
        %v603 = vadd.f32 0.0, %v602
        %v604 = vpop.f32.mrb[0].mxu0
        %605 = vdwg.mxu0
        %v606 = vpack.c.bf16 %v547, %v544
        %v607 = vpack.c.bf16 %v555, %v552
        %v608 = vpack.c.bf16 %v563, %v560
        %v609 = vpack.c.bf16 %v571, %v568
        %v610 = vpack.c.bf16 %v579, %v576
        %v611 = vpack.c.bf16 %v587, %v584
        %v612 = vpack.c.bf16 %v595, %v592
        %v613 = vpack.c.bf16 %v603, %v600
        %614 = vst.msk [vmem:[#allocation3] sm:$0xff] %vm440, %v606
        %615 = vst.msk [vmem:[#allocation3 + $0x8] sm:$0xff] %vm440, %v607
        %616 = vst.msk [vmem:[#allocation3 + $0x10] sm:$0xff] %vm440, %v608
        %617 = vst.msk [vmem:[#allocation3 + $0x18] sm:$0xff] %vm440, %v609
        %618 = vst.msk [vmem:[#allocation3 + $0x20] sm:$0xff] %vm440, %v610
        %619 = vst.msk [vmem:[#allocation3 + $0x28] sm:$0xff] %vm440, %v611
        %620 = vst.msk [vmem:[#allocation3 + $0x30] sm:$0xff] %vm440, %v612
        %621 = vst.msk [vmem:[#allocation3 + $0x38] sm:$0xff] %vm440, %v613
        %vm622 = vcmask 57344
        %623 = vst.msk [vmem:[#allocation5] sm:$0x1] %vm622, 0.0
        %624 = vst.msk [vmem:[#allocation6] sm:$0x1] %vm622, 0.0
      $region48: #{kfac_forward.1} parent=43 // pred_fallthru
        _
      %v625 = vld [vmem:[%s296] sm:$0xf]
      %v626 = vld [vmem:[%s296 + $0x4] sm:$0xf]
      %v627 = vld [vmem:[%s296 + $0x8] sm:$0xf]
      %v628 = vld [vmem:[%s296 + $0xc] sm:$0xf]
      %v629 = vld [vmem:[#allocation3] sm:$0xff]
      %v630 = vld [vmem:[#allocation3 + $0x8] sm:$0xff]
      %v631 = vld [vmem:[#allocation3 + $0x10] sm:$0xff]
      %v632 = vld [vmem:[#allocation3 + $0x18] sm:$0xff]
      %v633 = vld [vmem:[#allocation3 + $0x20] sm:$0xff]
      %v634 = vld [vmem:[#allocation3 + $0x28] sm:$0xff]
      %v635 = vld [vmem:[#allocation3 + $0x30] sm:$0xff]
      %v636 = vld [vmem:[#allocation3 + $0x38] sm:$0xff]
      %v641 = vunpack.c.l.b16 %v625
      %v642 = vunpack.c.l.b16 %v626
      %v643 = vunpack.c.l.b16 %v627
      %v644 = vunpack.c.l.b16 %v628
      %v645 = vpack.c.b16 %v642, %v641
      %v646 = vpack.c.b16 %v644, %v643
      %649 = vmatprep.subr.bf16.mxu0 0
      %650 = vmatpush1.bf16.msra.mxu0 %v629
      %651 = vmatprep.subr.bf16.mxu0 0
      %652 = vmatpush1.bf16.msra.mxu0 %v630
      %653 = vmatprep.subr.bf16.mxu0 0
      %654 = vmatpush1.bf16.msra.mxu0 %v631
      %655 = vmatprep.subr.bf16.mxu0 0
      %656 = vmatpush1.bf16.msra.mxu0 %v632
      %657 = vmatprep.subr.bf16.mxu0 0
      %658 = vmatpush1.bf16.msra.mxu0 %v633
      %659 = vmatprep.subr.bf16.mxu0 0
      %660 = vmatpush1.bf16.msra.mxu0 %v634
      %661 = vmatprep.subr.bf16.mxu0 0
      %662 = vmatpush1.bf16.msra.mxu0 %v635
      %663 = vmatprep.subr.bf16.mxu0 0
      %664 = vmatpush1.bf16.msra.mxu0 %v636
      %665 = vmatprep.subr.bf16.mxu0 0
      %666 = vmatpush1.bf16.msra.mxu0 0
      %667 = vmatprep.subr.bf16.mxu0 0
      %668 = vmatpush1.bf16.msra.mxu0 0
      %669 = vmatprep.subr.bf16.mxu0 0
      %670 = vmatpush1.bf16.msra.mxu0 0
      %671 = vmatprep.subr.bf16.mxu0 0
      %672 = vmatpush1.bf16.msra.mxu0 0
      %673 = vmatprep.subr.bf16.mxu0 0
      %674 = vmatpush1.bf16.msra.mxu0 0
      %675 = vmatprep.subr.bf16.mxu0 0
      %676 = vmatpush1.bf16.msra.mxu0 0
      %677 = vmatprep.subr.bf16.mxu0 0
      %678 = vmatpush1.bf16.msra.mxu0 0
      %679 = vmatprep.subr.bf16.mxu0 0
      %680 = vmatpush1.bf16.msra.mxu0 0
      %681 = vmatprep.mubr.bf16.mxu0 0
      %682 = vmatmul.mubr.bf16.gmra.mrb[0].mxu0 %v645
      %v683 = vpop.f32.mrb[0].mxu0
      %v684 = vadd.f32 0.0, %v683
      %v685 = vpop.f32.mrb[0].mxu0
      %v686 = vpop.f32.mrb[0].mxu0
      %v687 = vadd.f32 0.0, %v686
      %v688 = vpop.f32.mrb[0].mxu0
      %689 = vmatprep.mubr.bf16.mxu0 0
      %690 = vmatmul.mubr.bf16.gmra.mrb[0].mxu0 %v646
      %v691 = vpop.f32.mrb[0].mxu0
      %v692 = vadd.f32 0.0, %v691
      %v693 = vpop.f32.mrb[0].mxu0
      %v694 = vpop.f32.mrb[0].mxu0
      %v695 = vadd.f32 0.0, %v694
      %v696 = vpop.f32.mrb[0].mxu0
      %697 = vdwg.mxu0
      %v698 = vld [vmem:[%s4] sm:$0xf]
      %v699 = vld [vmem:[%s4 + $0x4] sm:$0xf]
      %v700 = vld [vmem:[%s4 + $0x8] sm:$0xf]
      %v701 = vld [vmem:[%s4 + $0xc] sm:$0xf]
      %v702 = vpack.c.bf16 %v687, %v684
      %v703 = vpack.c.bf16 %v695, %v692
      %v708 = vunpack.c.l.b16 %v698
      %v709 = vunpack.c.l.b16 %v699
      %v710 = vunpack.c.l.b16 %v700
      %v711 = vunpack.c.l.b16 %v701
      %v712 = vpack.c.b16 %v709, %v708
      %v713 = vpack.c.b16 %v711, %v710
      %vm714 = vcmask 261120
      %v716 = vsel %vm714, %v712, 0
      %v719 = vsel %vm714, %v713, 0
      %721 = vmatprep.subr.bf16.mxu0 0
      %722 = vmatpush1.bf16.msra.mxu0 %v702
      %723 = vmatprep.subr.bf16.mxu0 0
      %724 = vmatpush1.bf16.msra.mxu0 %v703
      %725 = vmatprep.subr.bf16.mxu0 0
      %726 = vmatpush1.bf16.msra.mxu0 0
      %727 = vmatprep.subr.bf16.mxu0 0
      %728 = vmatpush1.bf16.msra.mxu0 0
      %729 = vmatprep.subr.bf16.mxu0 0
      %730 = vmatpush1.bf16.msra.mxu0 0
      %731 = vmatprep.subr.bf16.mxu0 0
      %732 = vmatpush1.bf16.msra.mxu0 0
      %733 = vmatprep.subr.bf16.mxu0 0
      %734 = vmatpush1.bf16.msra.mxu0 0
      %735 = vmatprep.subr.bf16.mxu0 0
      %736 = vmatpush1.bf16.msra.mxu0 0
      %737 = vmatprep.subr.bf16.mxu0 0
      %738 = vmatpush1.bf16.msra.mxu0 0
      %739 = vmatprep.subr.bf16.mxu0 0
      %740 = vmatpush1.bf16.msra.mxu0 0
      %741 = vmatprep.subr.bf16.mxu0 0
      %742 = vmatpush1.bf16.msra.mxu0 0
      %743 = vmatprep.subr.bf16.mxu0 0
      %744 = vmatpush1.bf16.msra.mxu0 0
      %745 = vmatprep.subr.bf16.mxu0 0
      %746 = vmatpush1.bf16.msra.mxu0 0
      %747 = vmatprep.subr.bf16.mxu0 0
      %748 = vmatpush1.bf16.msra.mxu0 0
      %749 = vmatprep.subr.bf16.mxu0 0
      %750 = vmatpush1.bf16.msra.mxu0 0
      %751 = vmatprep.subr.bf16.mxu0 0
      %752 = vmatpush1.bf16.msra.mxu0 0
      %753 = vmatprep.mubr.bf16.mxu0 0
      %754 = vmatmul.mubr.bf16.gmra.mrb[0].mxu0 %v716
      %v755 = vpop.f32.mrb[0].mxu0
      %v756 = vadd.f32 0.0, %v755
      %v757 = vpop.f32.mrb[0].mxu0
      %v758 = vpop.f32.mrb[0].mxu0
      %v759 = vadd.f32 0.0, %v758
      %v760 = vpop.f32.mrb[0].mxu0
      %761 = vmatprep.mubr.bf16.mxu0 0
      %762 = vmatmul.mubr.bf16.gmra.mrb[0].mxu0 %v719
      %v763 = vpop.f32.mrb[0].mxu0
      %v764 = vadd.f32 0.0, %v763
      %v765 = vpop.f32.mrb[0].mxu0
      %v766 = vpop.f32.mrb[0].mxu0
      %v767 = vadd.f32 0.0, %v766
      %v768 = vpop.f32.mrb[0].mxu0
      %769 = vdwg.mxu0
      %v770 = vld [vmem:[#allocation2] sm:$0xff]
      %v771 = vld [vmem:[#allocation2 + $0x8] sm:$0xff]
      %v772 = vld [vmem:[#allocation2 + $0x10] sm:$0xff]
      %v773 = vld [vmem:[#allocation2 + $0x18] sm:$0xff]
      %v774 = vadd.f32 %v770, %v756
      %v775 = vadd.f32 %v771, %v759
      %v776 = vadd.f32 %v772, %v764
      %v777 = vadd.f32 %v773, %v767
      %v778 = vmax.f32 %v774, 0.0
      %v779 = vmax.f32 %v775, 0.0
      %v780 = vmax.f32 %v776, 0.0
      %v781 = vmax.f32 %v777, 0.0
      %v782 = vld [vmem:[%s301] sm:$0xff]
      %v783 = vld [vmem:[%s301 + $0x8] sm:$0xff]
      %v784 = vld [vmem:[%s301 + $0x10] sm:$0xff]
      %v785 = vld [vmem:[%s301 + $0x18] sm:$0xff]
      %787 = vset.pattern.permute.xlu0 0
      %788 = vperm.xlu0 %787, %v782
      %v789 = vpop.permute.xlu0 %788
      %792 = vset.pattern.permute.xlu0 0
      %793 = vperm.xlu0 %792, %v783
      %v794 = vpop.permute.xlu0 %793
      %797 = vset.pattern.permute.xlu0 0
      %798 = vperm.xlu0 %797, %v784
      %v799 = vpop.permute.xlu0 %798
      %802 = vset.pattern.permute.xlu0 0
      %803 = vperm.xlu0 %802, %v785
      %v804 = vpop.permute.xlu0 %803
      %v806 = vmul.f32 %v778, %v789
      %v807 = vmul.f32 %v779, %v794
      %v808 = vmul.f32 %v780, %v799
      %v809 = vmul.f32 %v781, %v804
      %vm810 = vcmask 64512
      %v811 = vsel %vm810, %v806, 0.0
      %v812 = vsel %vm810, %v807, 0.0
      %v813 = vadd.f32 %v811, %v812
      %v814 = vsel %vm810, %v808, 0.0
      %v815 = vadd.f32 %v813, %v814
      %v816 = vsel %vm810, %v809, 0.0
      %v817 = vadd.f32 %v815, %v816
      %v818 = vrot.slane %v817, 4
      %v819 = vadd.f32 %v817, %v818
      %v820 = vrot.slane %v819, 2
      %v821 = vadd.f32 %v819, %v820
      %v822 = vrot.slane %v821, 1
      %v823 = vadd.f32 %v821, %v822
      %s824 = sld [smem:[#allocation8 + %s29]]
      %v825 = vstv %s824
      %v826 = vadd.f32 %v823, %v825
      // Predicated region
      $region49: #{kfac_forward.1} parent=43 // pred_check
        %p827 = pneg %p307
      $region50: #{kfac_forward.1} parent=43 // pred_check_branch
        %829 = sbr.rel (%p827) target = $region52
      $region51: #{kfac_forward.1} parent=43 // pred_region
        %vm830 = vcmask 57344
        %831 = vst.msk [vmem:[#allocation4] sm:$0x1] %vm830, %v826
      $region52: #{kfac_forward.1} parent=43 // pred_fallthru
        _
      %v832 = vld [vmem:[#allocation4] sm:$0x1]
      %v833 = vsub.f32 %v826, %v832
      %v834 = vld [vmem:[#allocation5] sm:$0x1]
      %v835 = vadd.f32 %v834, %v833
      %vm836 = vcmask 57344
      %837 = vst.msk [vmem:[#allocation5] sm:$0x1] %vm836, %v835
      %v838 = vld [vmem:[#allocation6] sm:$0x1]
      %v839 = vmul.f32 %v833, %v833
      %v840 = vadd.f32 %v838, %v839
      %841 = vst.msk [vmem:[#allocation6] sm:$0x1] %vm836, %v840
      %p842 = scmp.eq.s32.totalorder %s29, 9
      // Predicated region
      $region53: #{kfac_forward.1} parent=43 // pred_check
        %p843 = pneg %p842
      $region54: #{kfac_forward.1} parent=43 // pred_check_branch
        %845 = sbr.rel (%p843) target = $region56
      $region55: #{kfac_forward.1} parent=43 // pred_region
        %v846 = vld [vmem:[#allocation5] sm:$0x1]
        %v847 = vmul.f32 %v846, 0.1
        %v848 = vld [vmem:[#allocation4] sm:$0x1]
        %v849 = vadd.f32 %v848, %v847
        %v850 = vld [vmem:[#allocation6] sm:$0x1]
        %v851 = vmul.f32 %v850, 0.1
        %v852 = vmul.f32 %v847, %v847
        %v853 = vsub.f32 %v851, %v852
        %854 = vst.msk [vmem:[%s305] sm:$0x1] %vm836, %v849
        %v855 = vmax.f32 %v853, 0.0
        %v856 = vrsqrt.pop %v855
        %v857 = vmul.f32 %v855, %v856
        %vm858 = vcmp.eq.f32.partialorder %v855, inf
        %v859 = vsel %vm858, %v855, %v857
        %vm860 = vcmp.eq.f32.partialorder %v855, 0.0
        %v861 = vand.u32 %v855, 2147483648
        %v862 = vsel %vm860, %v861, %v859
        %863 = vst.msk [vmem:[%s305 + $0x1] sm:$0x1] %vm836, %v862
      $region56: #{kfac_forward.1} parent=43 // pred_fallthru
        _
      %p864 = scmp.lt.s32.totalorder %s28, 0
      %s865 = scalar_select %p864, %s28, 0
      %s866 = smul.addr %s865, 2
      %s867 = scalar_lea.vmem %s7, %s866
      // Predicated region
      $region57: #{kfac_forward.1} parent=43 // pred_check
        %p868 = pneg %p195
      $region58: #{kfac_forward.1} parent=43 // pred_check_branch
        %870 = sbr.rel (%p868) target = $region60
      $region59: #{kfac_forward.1} parent=43 // pred_region
        _
      $region60: #{kfac_forward.1} parent=43 // pred_fallthru
        _
      // Predicated region
      $region61: #{kfac_forward.1} parent=43 // pred_check
        %p871 = pneg %p195
      $region62: #{kfac_forward.1} parent=43 // pred_check_branch
        %873 = sbr.rel (%p871) target = $region64
      $region63: #{kfac_forward.1} parent=43 // pred_region
        %p874 = scmp.lt.s32.totalorder %s28, 0
        %s875 = scalar_select %p874, %s28, 0
        %s876 = smul.addr %s875, 2
        %s877 = scalar_lea.vmem %s7, %s876
      $region64: #{kfac_forward.1} parent=43 // pred_fallthru
        _
    $region44: #{kfac_forward.1} parent=5 // pred_fallthru
      _
    %p878 = scmp.le.s32.totalorder 2, %s19
    // Predicated region
    $region65: #{kfac_forward.1} parent=5 // pred_check
      %p879 = pneg %p878
    $region66: #{kfac_forward.1} parent=5 // pred_check_branch
      %881 = sbr.rel (%p879) target = $region68
    $region67: #{kfac_forward.1} parent=5 // pred_region
      %s882 = ssub.s32 %s19, 2
    $region68: #{kfac_forward.1} parent=5 // pred_fallthru
      _
  $region6: #{kfac_forward.1} parent=0 // loop_footer
    %s23 = sadd.s32 1, %s19
  $region7: #{kfac_forward.1} parent=0 // loop_footer_branch
    %18 = sbr.rel target = $region3
  $region8: #{kfac_forward.1} parent=0 // loop_exit
    _

</llo_original>
